<compile_context>
chip_gen: v7x
topology: tpu7x:2x2x1
jax: 0.10.0
libtpu: 0.0.40
codegen_flags: <defaults>
</compile_context>

<pallas_src>
import functools

import jax
import jax.numpy as jnp
from jax.experimental import pallas as pl
from jax.experimental.pallas import tpu as pltpu

# -----------------------------------------------------------------------------
# Problem sizes (regression1 of Net)
# -----------------------------------------------------------------------------
IN_FEATURES = 5
HIDDEN = 55
OUT_FEATURES = 4

# Padded sizes used inside the kernel (zero padding is mathematically inert).
PAD_IN = 8      # K of first matmul; kept tiny to minimize x DMA traffic
PAD_HID = 64    # >= 55
PAD_OUT = 128   # lane-dense output stores
SUBLANE = 8
MAX_TB = 512    # batch tile: multiple of 256 (v6e/v7x) and 128 (v5e)


# -----------------------------------------------------------------------------
# Pallas kernel: fused  out = relu(x @ W1 + b1) @ W2 + b2   for one batch tile
# -----------------------------------------------------------------------------
def _mlp_kernel(x_ref, w1_ref, b1_ref, w2_ref, b2_ref, o_ref):
    x = x_ref[...]                                        # [TB, PAD_IN]
    h = jnp.dot(x, w1_ref[...],
                preferred_element_type=jnp.float32)       # [TB, PAD_HID]
    h = jnp.maximum(h + b1_ref[...], 0.0)                 # bias + ReLU
    o = jnp.dot(h, w2_ref[...],
                preferred_element_type=jnp.float32)       # [TB, PAD_OUT]
    o_ref[...] = o + b2_ref[...]


@functools.partial(jax.jit, static_argnames=("tb",))
def _mlp_pallas(x_pad, w1_pad, b1_pad, w2_pad, b2_pad, *, tb):
    b_pad = x_pad.shape[0]
    return pl.pallas_call(
        _mlp_kernel,
        out_shape=jax.ShapeDtypeStruct((b_pad, PAD_OUT), jnp.float32),
        grid_spec=pl.GridSpec(
            grid=(b_pad // tb,),
            in_specs=[
                pl.BlockSpec((tb, PAD_IN), lambda i: (i, 0)),       # x tile
                pl.BlockSpec((PAD_IN, PAD_HID), lambda i: (0, 0)),  # W1 (resident)
                pl.BlockSpec((1, PAD_HID), lambda i: (0, 0)),       # b1
                pl.BlockSpec((PAD_HID, PAD_OUT), lambda i: (0, 0)), # W2 (resident)
                pl.BlockSpec((1, PAD_OUT), lambda i: (0, 0)),       # b2
            ],
            out_specs=pl.BlockSpec((tb, PAD_OUT), lambda i: (i, 0)),
        ),
        compiler_params=pltpu.CompilerParams(
            dimension_semantics=("parallel",)),  # lets v7x use both TCs
    )(x_pad, w1_pad, b1_pad, w2_pad, b2_pad)


# -----------------------------------------------------------------------------
# Parameter initialization (mimics nn.Linear default init:
# uniform(-1/sqrt(fan_in), +1/sqrt(fan_in)) for weight and bias).
# Padding is done HERE, once, so the forward path never re-pads weights.
# -----------------------------------------------------------------------------
def _init_linear(key, fan_in, fan_out):
    kw, kb = jax.random.split(key)
    bound = 1.0 / jnp.sqrt(float(fan_in))
    # Stored transposed relative to PyTorch ([in, out]) so the kernel does x @ W.
    w = jax.random.uniform(kw, (fan_in, fan_out), jnp.float32, -bound, bound)
    b = jax.random.uniform(kb, (fan_out,), jnp.float32, -bound, bound)
    return w, b


def init_params(key):
    k1, k2 = jax.random.split(key)
    w1, b1 = _init_linear(k1, IN_FEATURES, HIDDEN)    # Linear(5, 55)
    w2, b2 = _init_linear(k2, HIDDEN, OUT_FEATURES)   # Linear(55, 4)

    w1_pad = jnp.zeros((PAD_IN, PAD_HID), jnp.float32) \
        .at[:IN_FEATURES, :HIDDEN].set(w1)
    b1_pad = jnp.zeros((1, PAD_HID), jnp.float32).at[0, :HIDDEN].set(b1)
    w2_pad = jnp.zeros((PAD_HID, PAD_OUT), jnp.float32) \
        .at[:HIDDEN, :OUT_FEATURES].set(w2)
    b2_pad = jnp.zeros((1, PAD_OUT), jnp.float32) \
        .at[0, :OUT_FEATURES].set(b2)
    return {"w1": w1_pad, "b1": b1_pad, "w2": w2_pad, "b2": b2_pad}


# -----------------------------------------------------------------------------
# Forward wrapper: pad x to (B_pad, 8), run kernel, slice result.
# (Padded batch rows compute relu(b1)@W2+b2 — garbage — which is why the
#  trailing [:n] slice must stay.)
# -----------------------------------------------------------------------------
def net_forward(params, x):
    n = x.shape[0]
    b8 = ((n + SUBLANE - 1) // SUBLANE) * SUBLANE
    tb = MAX_TB if b8 >= MAX_TB else b8
    b_pad = ((b8 + tb - 1) // tb) * tb

    x_pad = jnp.pad(x.astype(jnp.float32),
                    ((0, b_pad - n), (0, PAD_IN - IN_FEATURES)))

    out_pad = _mlp_pallas(x_pad, params["w1"], params["b1"],
                          params["w2"], params["b2"], tb=tb)
    return out_pad[:n, :OUT_FEATURES]


# -----------------------------------------------------------------------------
# Main
# -----------------------------------------------------------------------------
if __name__ == "__main__":
    key = jax.random.PRNGKey(0)
    k_params, k_x = jax.random.split(key)

    params = init_params(k_params)

    # NOTE: the module docstring says [N, 3] but regression1 = Linear(5, 55),
    # so the forward actually requires [N, 5] inputs; we follow the layer defs.
    N = 8
    x = jax.random.normal(k_x, (N, IN_FEATURES), jnp.float32)

    out = jax.block_until_ready(net_forward(params, x))

    # Cross-check against plain-JAX reference (slice the padded params).
    w1 = params["w1"][:IN_FEATURES, :HIDDEN]
    b1 = params["b1"][0, :HIDDEN]
    w2 = params["w2"][:HIDDEN, :OUT_FEATURES]
    b2 = params["b2"][0, :OUT_FEATURES]
    ref = jnp.maximum(x @ w1 + b1, 0.0) @ w2 + b2

    assert out.shape == (N, OUT_FEATURES)
    assert bool(jnp.allclose(out, ref, atol=1e-5, rtol=1e-5))

    print("KERNEL_OK")
</pallas_src>

<mosaic_0001>
module attributes {stable_mosaic.version = 11 : i64} {
  func.func @_mlp_kernel(%arg0: i32, %arg1: memref<8x8xf32, #tpu.memory_space<vmem>>, %arg2: memref<8x64xf32, #tpu.memory_space<vmem>>, %arg3: memref<1x64xf32, #tpu.memory_space<vmem>>, %arg4: memref<64x128xf32, #tpu.memory_space<vmem>>, %arg5: memref<1x128xf32, #tpu.memory_space<vmem>>, %arg6: memref<8x128xf32, #tpu.memory_space<vmem>>) attributes {dimension_semantics = [#tpu.dimension_semantics<parallel>], iteration_bounds = array<i64: 1>, scalar_prefetch = 0 : i64, scratch_operands = 0 : i64, tpu.core_type = #tpu.core_type<tc>, window_params = [{transform_indices = @transform_0, window_bounds = array<i64: 8, 8>}, {pipeline_mode = #tpu.pipeline_mode<synchronous>, transform_indices = @transform_1, window_bounds = array<i64: 8, 64>}, {pipeline_mode = #tpu.pipeline_mode<synchronous>, transform_indices = @transform_2, window_bounds = array<i64: 1, 64>}, {pipeline_mode = #tpu.pipeline_mode<synchronous>, transform_indices = @transform_3, window_bounds = array<i64: 64, 128>}, {pipeline_mode = #tpu.pipeline_mode<synchronous>, transform_indices = @transform_4, window_bounds = array<i64: 1, 128>}, {transform_indices = @transform_5, window_bounds = array<i64: 8, 128>}]} {
    %c0 = arith.constant 0 : index
    %c0_0 = arith.constant 0 : index
    %0 = vector.load %arg1[%c0, %c0_0] : memref<8x8xf32, #tpu.memory_space<vmem>>, vector<8x8xf32>
    %c0_1 = arith.constant 0 : index
    %c0_2 = arith.constant 0 : index
    %1 = vector.load %arg2[%c0_1, %c0_2] : memref<8x64xf32, #tpu.memory_space<vmem>>, vector<8x64xf32>
    %cst = arith.constant dense<0.000000e+00> : vector<8x64xf32>
    %2 = tpu.matmul %0, %1, %cst {dimension_numbers = #tpu.dot_dimension_numbers<[1], [0], [0], [1], [0, 0, 1, 1], [], []>} : vector<8x8xf32>, vector<8x64xf32>, vector<8x64xf32> -> vector<8x64xf32>
    %c0_3 = arith.constant 0 : index
    %c0_4 = arith.constant 0 : index
    %3 = vector.load %arg3[%c0_3, %c0_4] : memref<1x64xf32, #tpu.memory_space<vmem>>, vector<1x64xf32>
    %4 = vector.broadcast %3 : vector<1x64xf32> to vector<8x64xf32>
    %5 = arith.addf %2, %4 : vector<8x64xf32>
    %cst_5 = arith.constant 0.000000e+00 : f32
    %6 = vector.broadcast %cst_5 : f32 to vector<8x64xf32>
    %7 = arith.maximumf %5, %6 : vector<8x64xf32>
    %c0_6 = arith.constant 0 : index
    %c0_7 = arith.constant 0 : index
    %8 = vector.load %arg4[%c0_6, %c0_7] : memref<64x128xf32, #tpu.memory_space<vmem>>, vector<64x128xf32>
    %cst_8 = arith.constant dense<0.000000e+00> : vector<8x128xf32>
    %9 = tpu.matmul %7, %8, %cst_8 {dimension_numbers = #tpu.dot_dimension_numbers<[1], [0], [0], [1], [0, 0, 1, 1], [], []>} : vector<8x64xf32>, vector<64x128xf32>, vector<8x128xf32> -> vector<8x128xf32>
    %c0_9 = arith.constant 0 : index
    %c0_10 = arith.constant 0 : index
    %10 = vector.load %arg5[%c0_9, %c0_10] : memref<1x128xf32, #tpu.memory_space<vmem>>, vector<1x128xf32>
    %11 = vector.broadcast %10 : vector<1x128xf32> to vector<8x128xf32>
    %12 = arith.addf %9, %11 : vector<8x128xf32>
    %c0_11 = arith.constant 0 : index
    %c0_12 = arith.constant 0 : index
    %13 = vector.load %arg6[%c0_11, %c0_12] : memref<8x128xf32, #tpu.memory_space<vmem>>, vector<8x128xf32>
    tpu.vector_store %arg6[%c0_11, %c0_12], %12 {strides = array<i32>} : memref<8x128xf32, #tpu.memory_space<vmem>>, vector<8x128xf32>,
    return
  }
  func.func @transform_0(%arg0: i32) -> (i32, i32) {
    %c0_i32 = arith.constant 0 : i32
    %c0_i32_0 = arith.constant 0 : i32
    return %arg0, %c0_i32 : i32, i32
  }
  func.func @transform_1(%arg0: i32) -> (i32, i32) {
    %c0_i32 = arith.constant 0 : i32
    %c0_i32_0 = arith.constant 0 : i32
    %c0_i32_1 = arith.constant 0 : i32
    return %c0_i32, %c0_i32_0 : i32, i32
  }
  func.func @transform_2(%arg0: i32) -> (i32, i32) {
    %c0_i32 = arith.constant 0 : i32
    %c0_i32_0 = arith.constant 0 : i32
    %c0_i32_1 = arith.constant 0 : i32
    return %c0_i32, %c0_i32_0 : i32, i32
  }
  func.func @transform_3(%arg0: i32) -> (i32, i32) {
    %c0_i32 = arith.constant 0 : i32
    %c0_i32_0 = arith.constant 0 : i32
    %c0_i32_1 = arith.constant 0 : i32
    return %c0_i32, %c0_i32_0 : i32, i32
  }
  func.func @transform_4(%arg0: i32) -> (i32, i32) {
    %c0_i32 = arith.constant 0 : i32
    %c0_i32_0 = arith.constant 0 : i32
    %c0_i32_1 = arith.constant 0 : i32
    return %c0_i32, %c0_i32_0 : i32, i32
  }
  func.func @transform_5(%arg0: i32) -> (i32, i32) {
    %c0_i32 = arith.constant 0 : i32
    %c0_i32_0 = arith.constant 0 : i32
    return %arg0, %c0_i32 : i32, i32
  }
}

</mosaic_0001>

<llo_original>
// kernel: _mlp_pallas.1
$region0: #{_mlp_pallas.1}
  #allocation0 [shape = 'u32[]', space=smem, size = 0x4, offset = 0x4, fixed_abs, tag = 'smem constant byte address 0x4 - core index']
  #allocation1 [shape = 'u32[144,128]{1,0:T(1,128)}', space=vmem, size = 0x12000, scoped, tag = 'internal scratch']
  %s0 = inlined_call_operand.hbm [shape: f32[8,8], index: 0, kind: input, shape index: {}]
  %s1 = inlined_call_operand.hbm [shape: f32[8,64], index: 1, kind: input, shape index: {}]
  %s2 = inlined_call_operand.vmem [shape: f32[1,64], index: 2, kind: input, shape index: {}]
  %s3 = inlined_call_operand.hbm [shape: f32[64,128], index: 3, kind: input, shape index: {}]
  %s4 = inlined_call_operand.vmem [shape: f32[1,128], index: 4, kind: input, shape index: {}]
  %s5 = inlined_call_operand.hbm [shape: f32[8,128], index: 5, kind: output, shape index: {}]
  %s6 = sld [smem:[#allocation0]]
  $region42: #{_mlp_pallas.1} parent=0
    _
  %s8 = ssub.s32 1, %s6
  %s9 = scalar_select 0, %s8, %s6
  $region1: #{_mlp_pallas.1} parent=0
    #allocation2 [shape = 'u8[4096]{0}', space=vmem, size = 0x1000, scoped, tag = 'input window, operand 0, single buffered']
    #allocation3 [shape = 's32[1]{0}', space=sflag, size = 0x4, scoped, tag = 'scoped memory for _mlp_pallas.1']
    #allocation4 [shape = 's32[1]{0}', space=sflag, size = 0x4, scoped, tag = 'scoped memory for _mlp_pallas.1']
    #allocation5 [shape = 'u8[4096]{0}', space=vmem, size = 0x1000, scoped, tag = 'input window, operand 1, single buffered']
    #allocation6 [shape = 's32[1]{0}', space=sflag, size = 0x4, scoped, tag = 'scoped memory for _mlp_pallas.1']
    #allocation7 [shape = 'u8[32768]{0}', space=vmem, size = 0x8000, scoped, tag = 'input window, operand 3, single buffered']
    #allocation8 [shape = 'u8[4096]{0}', space=vmem, size = 0x1000, scoped, tag = 'output window, operand 0, single buffered']
    %10 = vsyncpa [#allocation3], 0
    %11 = vsyncpa [#allocation6], 0
    %12 = vsyncpa [#allocation4], 0
    // Predicated region
    $region2: #{_mlp_pallas.1} parent=1 // pred_check
      _
    $region3: #{_mlp_pallas.1} parent=1 // pred_check_branch
      %14 = sbr.rel (0) target = $region5
    $region4: #{_mlp_pallas.1} parent=1 // pred_region
      %s16 = ssub.s32 128, 128
      %17 = vsyncadd [#allocation3], %s16
      %s19 = sshll.u32 [#allocation2], 4
      %s20 = int_to_ptr.vmem [resolvable:$true] %s19
      %22 = dma.hbm_to_vmem [thread:$0]  %s0, 128, %s20, [#allocation3]
    $region5: #{_mlp_pallas.1} parent=1 // pred_fallthru
      _
    // Predicated region
    $region6: #{_mlp_pallas.1} parent=1 // pred_check
      _
    $region7: #{_mlp_pallas.1} parent=1 // pred_check_branch
      %24 = sbr.rel (0) target = $region9
    $region8: #{_mlp_pallas.1} parent=1 // pred_region
      %s26 = ssub.s32 128, 128
      %27 = vsyncadd [#allocation6], %s26
      %s29 = sshll.u32 [#allocation5], 4
      %s30 = int_to_ptr.vmem [resolvable:$true] %s29
      %32 = dma.hbm_to_vmem [thread:$0]  %s1, 128, %s30, [#allocation6]
    $region9: #{_mlp_pallas.1} parent=1 // pred_fallthru
      _
    // Predicated region
    $region10: #{_mlp_pallas.1} parent=1 // pred_check
      _
    $region11: #{_mlp_pallas.1} parent=1 // pred_check_branch
      %34 = sbr.rel (0) target = $region13
    $region12: #{_mlp_pallas.1} parent=1 // pred_region
      _
    $region13: #{_mlp_pallas.1} parent=1 // pred_fallthru
      _
    // Predicated region
    $region14: #{_mlp_pallas.1} parent=1 // pred_check
      _
    $region15: #{_mlp_pallas.1} parent=1 // pred_check_branch
      %36 = sbr.rel (0) target = $region17
    $region16: #{_mlp_pallas.1} parent=1 // pred_region
      %s38 = ssub.s32 1024, 1024
      %39 = vsyncadd [#allocation6], %s38
      %s40 = sshll.u32 [#allocation7], 4
      %s41 = int_to_ptr.vmem [resolvable:$true] %s40
      %46 = dma.hbm_to_vmem [thread:$0]  %s3, 1024, %s41, [#allocation6], 128, 128, 8
    $region17: #{_mlp_pallas.1} parent=1 // pred_fallthru
      _
    // Predicated region
    $region18: #{_mlp_pallas.1} parent=1 // pred_check
      _
    $region19: #{_mlp_pallas.1} parent=1 // pred_check_branch
      %48 = sbr.rel (0) target = $region21
    $region20: #{_mlp_pallas.1} parent=1 // pred_region
      _
    $region21: #{_mlp_pallas.1} parent=1 // pred_fallthru
      _
    // Predicated region
    $region22: #{_mlp_pallas.1} parent=1 // pred_check
      _
    $region23: #{_mlp_pallas.1} parent=1 // pred_check_branch
      %50 = sbr.rel (0) target = $region25
    $region24: #{_mlp_pallas.1} parent=1 // pred_region
      %51 = dma.done [#allocation3], 128
    $region25: #{_mlp_pallas.1} parent=1 // pred_fallthru
      _
    // Predicated region
    $region26: #{_mlp_pallas.1} parent=1 // pred_check
      _
    $region27: #{_mlp_pallas.1} parent=1 // pred_check_branch
      %53 = sbr.rel (0) target = $region29
    $region28: #{_mlp_pallas.1} parent=1 // pred_region
      %54 = dma.done [#allocation6], 128
    $region29: #{_mlp_pallas.1} parent=1 // pred_fallthru
      _
    // Predicated region
    $region30: #{_mlp_pallas.1} parent=1 // pred_check
      _
    $region31: #{_mlp_pallas.1} parent=1 // pred_check_branch
      %56 = sbr.rel (0) target = $region33
    $region32: #{_mlp_pallas.1} parent=1 // pred_region
      %57 = dma.done [#allocation6], 1024
    $region33: #{_mlp_pallas.1} parent=1 // pred_fallthru
      _
    %v58 = vld [vmem:[#allocation2] sm:$0xff]
    %v59 = vld [vmem:[#allocation5] sm:$0xff]
    %v60 = vld [vmem:[%s2] sm:$0x1]
    %v62 = vlaneseq
    %v63 = vshrl.u32 %v62, 7
    %v64 = vsub.s32 0, %v63
    %v65 = vrot.slane %v60, %v64
    %vm67 = vcmask 64512
    %v69 = vsel %vm67, %v58, 0
    %71 = vmatprep.subr.mxu0 0.0
    %72 = vmatpush1.msra.mxu0 %v59
    %73 = vmatprep.subr.mxu0 0.0
    %74 = vmatpush1.msra.mxu0 0.0
    %75 = vmatprep.subr.mxu0 0.0
    %76 = vmatpush1.msra.mxu0 0.0
    %77 = vmatprep.subr.mxu0 0.0
    %78 = vmatpush1.msra.mxu0 0.0
    %79 = vmatprep.subr.mxu0 0.0
    %80 = vmatpush1.msra.mxu0 0.0
    %81 = vmatprep.subr.mxu0 0.0
    %82 = vmatpush1.msra.mxu0 0.0
    %83 = vmatprep.subr.mxu0 0.0
    %84 = vmatpush1.msra.mxu0 0.0
    %85 = vmatprep.subr.mxu0 0.0
    %86 = vmatpush1.msra.mxu0 0.0
    %87 = vmatprep.subr.mxu0 0.0
    %88 = vmatpush1.msra.mxu0 0.0
    %89 = vmatprep.subr.mxu0 0.0
    %90 = vmatpush1.msra.mxu0 0.0
    %91 = vmatprep.subr.mxu0 0.0
    %92 = vmatpush1.msra.mxu0 0.0
    %93 = vmatprep.subr.mxu0 0.0
    %94 = vmatpush1.msra.mxu0 0.0
    %95 = vmatprep.subr.mxu0 0.0
    %96 = vmatpush1.msra.mxu0 0.0
    %97 = vmatprep.subr.mxu0 0.0
    %98 = vmatpush1.msra.mxu0 0.0
    %99 = vmatprep.subr.mxu0 0.0
    %100 = vmatpush1.msra.mxu0 0.0
    %101 = vmatprep.subr.mxu0 0.0
    %102 = vmatpush1.msra.mxu0 0.0
    %103 = vmatprep.subr.mxu0 0.0
    %104 = vmatpush1.msra.mxu0 0.0
    %105 = vmatprep.subr.mxu0 0.0
    %106 = vmatpush1.msra.mxu0 0.0
    %107 = vmatprep.subr.mxu0 0.0
    %108 = vmatpush1.msra.mxu0 0.0
    %109 = vmatprep.subr.mxu0 0.0
    %110 = vmatpush1.msra.mxu0 0.0
    %111 = vmatprep.subr.mxu0 0.0
    %112 = vmatpush1.msra.mxu0 0.0
    %113 = vmatprep.subr.mxu0 0.0
    %114 = vmatpush1.msra.mxu0 0.0
    %115 = vmatprep.subr.mxu0 0.0
    %116 = vmatpush1.msra.mxu0 0.0
    %117 = vmatprep.subr.mxu0 0.0
    %118 = vmatpush1.msra.mxu0 0.0
    %119 = vmatprep.subr.mxu0 0.0
    %120 = vmatpush1.msra.mxu0 0.0
    %121 = vmatprep.subr.mxu0 0.0
    %122 = vmatpush1.msra.mxu0 0.0
    %123 = vmatprep.subr.mxu0 0.0
    %124 = vmatpush1.msra.mxu0 0.0
    %125 = vmatprep.subr.mxu0 0.0
    %126 = vmatpush1.msra.mxu0 0.0
    %127 = vmatprep.subr.mxu0 0.0
    %128 = vmatpush1.msra.mxu0 0.0
    %129 = vmatprep.subr.mxu0 0.0
    %130 = vmatpush1.msra.mxu0 0.0
    %131 = vmatprep.subr.mxu0 0.0
    %132 = vmatpush1.msra.mxu0 0.0
    %133 = vmatprep.subr.mxu0 0.0
    %134 = vmatpush1.msra.mxu0 0.0
    %135 = vmatprep.mubr.f32.mxu0 0.0
    %136 = vmatmul.mubr.f32.gmra.mrb[0].mxu0 %v69
    %v137 = vpop.f32.mrb[0].mxu0
    %v138 = vadd.f32 %v65, %v137
    %v139 = vpop.f32.mrb[0].mxu0
    %140 = vdwg.mxu0
    %v141 = vmax.f32 %v138, 0.0
    %v142 = vld [vmem:[#allocation7] sm:$0xff]
    %v143 = vld [vmem:[#allocation7 + $0x8] sm:$0xff]
    %v144 = vld [vmem:[#allocation7 + $0x10] sm:$0xff]
    %v145 = vld [vmem:[#allocation7 + $0x18] sm:$0xff]
    %v146 = vld [vmem:[#allocation7 + $0x20] sm:$0xff]
    %v147 = vld [vmem:[#allocation7 + $0x28] sm:$0xff]
    %v148 = vld [vmem:[#allocation7 + $0x30] sm:$0xff]
    %v149 = vld [vmem:[#allocation7 + $0x38] sm:$0xff]
    %v150 = vld [vmem:[%s4] sm:$0x1]
    %v152 = vlaneseq
    %v153 = vshrl.u32 %v152, 7
    %v154 = vsub.s32 0, %v153
    %v155 = vrot.slane %v150, %v154
    %vm157 = vcmask 523264
    %v159 = vsel %vm157, %v141, 0
    %161 = vmatprep.subr.mxu0 0.0
    %162 = vmatpush1.msra.mxu0 %v142
    %163 = vmatprep.subr.mxu0 0.0
    %164 = vmatpush1.msra.mxu0 %v143
    %165 = vmatprep.subr.mxu0 0.0
    %166 = vmatpush1.msra.mxu0 %v144
    %167 = vmatprep.subr.mxu0 0.0
    %168 = vmatpush1.msra.mxu0 %v145
    %169 = vmatprep.subr.mxu0 0.0
    %170 = vmatpush1.msra.mxu0 %v146
    %171 = vmatprep.subr.mxu0 0.0
    %172 = vmatpush1.msra.mxu0 %v147
    %173 = vmatprep.subr.mxu0 0.0
    %174 = vmatpush1.msra.mxu0 %v148
    %175 = vmatprep.subr.mxu0 0.0
    %176 = vmatpush1.msra.mxu0 %v149
    %177 = vmatprep.subr.mxu0 0.0
    %178 = vmatpush1.msra.mxu0 0.0
    %179 = vmatprep.subr.mxu0 0.0
    %180 = vmatpush1.msra.mxu0 0.0
    %181 = vmatprep.subr.mxu0 0.0
    %182 = vmatpush1.msra.mxu0 0.0
    %183 = vmatprep.subr.mxu0 0.0
    %184 = vmatpush1.msra.mxu0 0.0
    %185 = vmatprep.subr.mxu0 0.0
    %186 = vmatpush1.msra.mxu0 0.0
    %187 = vmatprep.subr.mxu0 0.0
    %188 = vmatpush1.msra.mxu0 0.0
    %189 = vmatprep.subr.mxu0 0.0
    %190 = vmatpush1.msra.mxu0 0.0
    %191 = vmatprep.subr.mxu0 0.0
    %192 = vmatpush1.msra.mxu0 0.0
    %193 = vmatprep.subr.mxu0 0.0
    %194 = vmatpush1.msra.mxu0 0.0
    %195 = vmatprep.subr.mxu0 0.0
    %196 = vmatpush1.msra.mxu0 0.0
    %197 = vmatprep.subr.mxu0 0.0
    %198 = vmatpush1.msra.mxu0 0.0
    %199 = vmatprep.subr.mxu0 0.0
    %200 = vmatpush1.msra.mxu0 0.0
    %201 = vmatprep.subr.mxu0 0.0
    %202 = vmatpush1.msra.mxu0 0.0
    %203 = vmatprep.subr.mxu0 0.0
    %204 = vmatpush1.msra.mxu0 0.0
    %205 = vmatprep.subr.mxu0 0.0
    %206 = vmatpush1.msra.mxu0 0.0
    %207 = vmatprep.subr.mxu0 0.0
    %208 = vmatpush1.msra.mxu0 0.0
    %209 = vmatprep.subr.mxu0 0.0
    %210 = vmatpush1.msra.mxu0 0.0
    %211 = vmatprep.subr.mxu0 0.0
    %212 = vmatpush1.msra.mxu0 0.0
    %213 = vmatprep.subr.mxu0 0.0
    %214 = vmatpush1.msra.mxu0 0.0
    %215 = vmatprep.subr.mxu0 0.0
    %216 = vmatpush1.msra.mxu0 0.0
    %217 = vmatprep.subr.mxu0 0.0
    %218 = vmatpush1.msra.mxu0 0.0
    %219 = vmatprep.subr.mxu0 0.0
    %220 = vmatpush1.msra.mxu0 0.0
    %221 = vmatprep.subr.mxu0 0.0
    %222 = vmatpush1.msra.mxu0 0.0
    %223 = vmatprep.subr.mxu0 0.0
    %224 = vmatpush1.msra.mxu0 0.0
    %225 = vmatprep.mubr.f32.mxu0 0.0
    %226 = vmatmul.mubr.f32.gmra.mrb[0].mxu0 %v159
    %v227 = vpop.f32.mrb[0].mxu0
    %v228 = vadd.f32 %v155, %v227
    %v229 = vpop.f32.mrb[0].mxu0
    %230 = vdwg.mxu0
    %231 = vst [vmem:[#allocation8] sm:$0xff] %v228
    // Predicated region
    $region34: #{_mlp_pallas.1} parent=1 // pred_check
      _
    $region35: #{_mlp_pallas.1} parent=1 // pred_check_branch
      %233 = sbr.rel (0) target = $region37
    $region36: #{_mlp_pallas.1} parent=1 // pred_region
      %s235 = ssub.s32 128, 128
      %236 = vsyncadd [#allocation4], %s235
      %s238 = sshll.u32 [#allocation8], 4
      %s239 = int_to_ptr.vmem [resolvable:$true] %s238
      %241 = dma.vmem_to_hbm [thread:$0]  %s239, 128, %s5, [#allocation4]
    $region37: #{_mlp_pallas.1} parent=1 // pred_fallthru
      _
    // Predicated region
    $region38: #{_mlp_pallas.1} parent=1 // pred_check
      _
    $region39: #{_mlp_pallas.1} parent=1 // pred_check_branch
      %243 = sbr.rel (0) target = $region41
    $region40: #{_mlp_pallas.1} parent=1 // pred_region
      %244 = dma.done [#allocation4], 128
    $region41: #{_mlp_pallas.1} parent=1 // pred_fallthru
      _
    %245 = vsyncpa [#allocation3], 1
    %246 = vsyncpa [#allocation6], 1
    %247 = vsyncpa [#allocation4], 1

</llo_original>
